<compile_context>
chip_gen: v7x
topology: tpu7x:2x2x1
jax: 0.10.0
libtpu: 0.0.40
codegen_flags: <defaults>
</compile_context>

<pallas_src>
import jax
import jax.numpy as jnp
from jax import lax
from jax.experimental import pallas as pl
from jax.experimental.pallas import tpu as pltpu

KH = KW = 3  # 3x3 conv, padding=1, stride=1


def conv_cumsum_kernel(w_ref, p_ref, o_ref):
    """Single MXU contraction for the whole problem.

    w_ref: (Cout, KK+1)      conv weight with channel-cumsum folded; last column = cumsum(bias)
    p_ref: (KK+1, N*HW)      im2col'd patches (pixels+batch lane-major); last row = ones
    o_ref: (Cout, N*HW)      conv + bias + channel-cumsum output
    """
    o_ref[...] = jnp.dot(w_ref[...], p_ref[...],
                         preferred_element_type=jnp.float32)


def _prepare_operands(x_nchw, w, b):
    """Layout-only glue: pad + im2col + fold cumsum/bias into the weight matrix."""
    N, Cin, H, W = x_nchw.shape
    Cout = w.shape[0]
    HW = H * W
    NHW = N * HW
    KK = KH * KW * Cin  # 18

    # ---- pad + im2col (pure layout, no arithmetic) ----
    xp = jnp.pad(x_nchw, ((0, 0), (0, 0), (1, 1), (1, 1)))            # (N, Cin, H+2, W+2)
    taps = [xp[:, :, kh:kh + H, kw:kw + W]
            for kh in range(KH) for kw in range(KW)]                  # 9 x (N, Cin, H, W)
    # K index = (kh*KW + kw)*Cin + ci ; column index = n*HW + h*W + w (batch folded into lanes)
    patches = jnp.stack(taps, axis=0)                                 # (9, N, Cin, H, W)
    patches = patches.transpose(0, 2, 1, 3, 4).reshape(KK, NHW)       # (18, N*HW)
    ones_row = jnp.ones((1, NHW), dtype=patches.dtype)
    patches = jnp.concatenate([patches, ones_row], axis=0)            # (19, N*HW)
    patches = patches.astype(jnp.bfloat16)

    # ---- fold the channel cumsum into weights/bias (cumsum is linear), bias as extra K column ----
    # w_flat index order matches the taps flattening: ((kh*KW + kw)*Cin + ci)
    w_flat = jnp.transpose(w, (0, 2, 3, 1)).reshape(Cout, KK)         # (Cout, 18)
    w_eff = jnp.cumsum(w_flat.astype(jnp.float32), axis=0)            # (Cout, 18)
    b_eff = jnp.cumsum(b.astype(jnp.float32)).reshape(Cout, 1)        # (Cout, 1)
    w_aug = jnp.concatenate([w_eff, b_eff], axis=1).astype(jnp.bfloat16)  # (Cout, 19)

    return w_aug, patches, (N, Cout, H, W)


@jax.jit
def model_forward(x_nchw, w, b):
    """x_nchw: (N, Cin, H, W) float32; w: (Cout, Cin, KH, KW); b: (Cout,). Returns (N, Cout, H, W)."""
    w_aug, patches, (N, Cout, H, W) = _prepare_operands(x_nchw, w, b)
    NHW = N * H * W

    out_flat = pl.pallas_call(
        conv_cumsum_kernel,
        out_shape=jax.ShapeDtypeStruct((Cout, NHW), jnp.float32),
        in_specs=[
            pl.BlockSpec(memory_space=pltpu.MemorySpace.VMEM),
            pl.BlockSpec(memory_space=pltpu.MemorySpace.VMEM),
        ],
        out_specs=pl.BlockSpec(memory_space=pltpu.MemorySpace.VMEM),
        compiler_params=pltpu.CompilerParams(
            allow_input_fusion=[True, True]),
    )(w_aug, patches)

    # (Cout, N*HW) -> (N, Cout, H, W): tiny layout op in the wrapper.
    return out_flat.reshape(Cout, N, H, W).transpose(1, 0, 2, 3)


def make_params(key, cin=2, cout=3):
    """Deterministic params. Weight is fake-quantized to an int8 grid to mimic
    torch.nn.quantized Conv2d weight storage (per-tensor symmetric)."""
    kw_, kb_ = jax.random.split(key)
    w = jax.random.normal(kw_, (cout, cin, KH, KW), dtype=jnp.float32) * 0.1
    b = jax.random.normal(kb_, (cout,), dtype=jnp.float32) * 0.1
    scale = jnp.maximum(jnp.max(jnp.abs(w)), 1e-8) / 127.0
    wq = jnp.clip(jnp.round(w / scale), -128, 127) * scale
    # TODO(synk): full quantized-tensor input/output semantics (qint8 activations,
    # output scale/zero-point requantization) have no clean float-Pallas equivalent;
    # we model the dequantized math path (int8-gridded weights, float activations).
    return wq, b


if __name__ == "__main__":
    key = jax.random.PRNGKey(0)
    kx, kp = jax.random.split(key)

    # small shapes consistent with the module: N=2, Cin=2 (required by the module), H=W=16
    x = jax.random.normal(kx, (2, 2, 16, 16), dtype=jnp.float32)
    w, b = make_params(kp)

    out = jax.block_until_ready(model_forward(x, w, b))
    assert out.shape == (2, 3, 16, 16)

    # tight check: identical bf16-rounded operands, contraction done by XLA in full f32
    w_aug, patches, (N, Cout, H, W) = _prepare_operands(x, w, b)
    ref_tight = jnp.dot(w_aug.astype(jnp.float32), patches.astype(jnp.float32),
                        precision=lax.Precision.HIGHEST)
    ref_tight = ref_tight.reshape(Cout, N, H, W).transpose(1, 0, 2, 3)
    assert jnp.max(jnp.abs(out - ref_tight)) < 1e-4, jnp.max(jnp.abs(out - ref_tight))

    # semantic check vs full-f32 conv + bias + cumsum reference (loose: bf16 MXU operands)
    ref_conv = lax.conv_general_dilated(
        x, w, window_strides=(1, 1), padding="SAME",
        dimension_numbers=("NCHW", "OIHW", "NCHW"),
        precision=lax.Precision.HIGHEST)
    ref = jnp.cumsum(ref_conv + b.reshape(1, -1, 1, 1), axis=1)
    assert jnp.max(jnp.abs(out - ref)) < 1e-1, jnp.max(jnp.abs(out - ref))

    print("KERNEL_OK")
</pallas_src>

<mosaic_0001>
module attributes {stable_mosaic.version = 11 : i64} {
  func.func @conv_cumsum_kernel(%arg0: memref<3x19xbf16, #tpu.memory_space<vmem>>, %arg1: memref<19x512xbf16, #tpu.memory_space<vmem>>, %arg2: memref<3x512xf32, #tpu.memory_space<vmem>>) attributes {dimension_semantics = [], scalar_prefetch = 0 : i64, scratch_operands = 0 : i64, tpu.core_type = #tpu.core_type<tc>} {
    %c0 = arith.constant 0 : index
    %c0_0 = arith.constant 0 : index
    %0 = vector.load %arg0[%c0, %c0_0] : memref<3x19xbf16, #tpu.memory_space<vmem>>, vector<3x19xbf16>
    %c0_1 = arith.constant 0 : index
    %c0_2 = arith.constant 0 : index
    %1 = vector.load %arg1[%c0_1, %c0_2] : memref<19x512xbf16, #tpu.memory_space<vmem>>, vector<19x512xbf16>
    %cst = arith.constant dense<0.000000e+00> : vector<3x512xf32>
    %2 = tpu.matmul %0, %1, %cst {dimension_numbers = #tpu.dot_dimension_numbers<[1], [0], [0], [1], [0, 0, 1, 1], [], []>} : vector<3x19xbf16>, vector<19x512xbf16>, vector<3x512xf32> -> vector<3x512xf32>
    %c0_3 = arith.constant 0 : index
    %c0_4 = arith.constant 0 : index
    %3 = vector.load %arg2[%c0_3, %c0_4] : memref<3x512xf32, #tpu.memory_space<vmem>>, vector<3x512xf32>
    tpu.vector_store %arg2[%c0_3, %c0_4], %2 {strides = array<i32>} : memref<3x512xf32, #tpu.memory_space<vmem>>, vector<3x512xf32>,
    return
  }
}

</mosaic_0001>

<llo_original>
// kernel: model_forward.2
$region0: #{model_forward.2}
  #allocation0 [shape = 'u32[]', space=smem, size = 0x4, offset = 0x4, fixed_abs, tag = 'smem constant byte address 0x4 - core index']
  #allocation1 [shape = 'u32[144,128]{1,0:T(1,128)}', space=vmem, size = 0x12000, scoped, tag = 'internal scratch']
  #allocation2 [shape = 'u32[2048]{0}', space=vmem, size = 0x2000, scoped, tag = 'scoped memory for model_forward.2']
  #allocation3 [shape = 'u32[2048]{0}', space=vmem, size = 0x2000, scoped, tag = 'scoped memory for model_forward.2']
  #allocation4 [shape = 'u32[2048]{0}', space=vmem, size = 0x2000, scoped, tag = 'scoped memory for model_forward.2']
  #allocation5 [shape = 'u32[2048]{0}', space=vmem, size = 0x2000, scoped, tag = 'scoped memory for model_forward.2']
  #allocation6 [shape = 'u32[2048]{0}', space=vmem, size = 0x2000, scoped, tag = 'scoped memory for model_forward.2']
  #allocation7 [shape = 'u32[2048]{0}', space=vmem, size = 0x2000, scoped, tag = 'scoped memory for model_forward.2']
  #allocation8 [shape = 'u32[2048]{0}', space=vmem, size = 0x2000, scoped, tag = 'scoped memory for model_forward.2']
  #allocation9 [shape = 'u32[2048]{0}', space=vmem, size = 0x2000, scoped, tag = 'scoped memory for model_forward.2']
  #allocation10 [shape = 'u32[2048]{0}', space=vmem, size = 0x2000, scoped, tag = 'scoped memory for model_forward.2']
  #allocation11 [shape = 'u32[2048]{0}', space=vmem, size = 0x2000, scoped, tag = 'scoped memory for model_forward.2']
  #allocation12 [shape = 'u32[2048]{0}', space=vmem, size = 0x2000, scoped, tag = 'scoped memory for model_forward.2']
  #allocation13 [shape = 'u32[2048]{0}', space=vmem, size = 0x2000, scoped, tag = 'scoped memory for model_forward.2']
  #allocation14 [shape = 'u32[2048]{0}', space=vmem, size = 0x2000, scoped, tag = 'scoped memory for model_forward.2']
  #allocation15 [shape = 'u32[2048]{0}', space=vmem, size = 0x2000, scoped, tag = 'scoped memory for model_forward.2']
  #allocation16 [shape = 'u32[2048]{0}', space=vmem, size = 0x2000, scoped, tag = 'scoped memory for model_forward.2']
  %s0 = inlined_call_operand.vmem [shape: bf16[18,512], index: 0, kind: input, shape index: {}]
  %s1 = inlined_call_operand.<no memory space> [shape: bf16[], index: 1, kind: input, shape index: {}]
  %s2 = inlined_call_operand.vmem [shape: bf16[3,1], index: 2, kind: input, shape index: {}]
  %s3 = inlined_call_operand.<no memory space> [shape: bf16[], index: 3, kind: input, shape index: {}]
  %s4 = inlined_call_operand.vmem [shape: bf16[3,18], index: 4, kind: input, shape index: {}]
  %s5 = inlined_call_operand.vmem [shape: f32[3,512], index: 5, kind: output, shape index: {}]
  %s6 = sld [smem:[#allocation0]]
  $region22: #{model_forward.2} parent=0
    _
  %s8 = ssub.s32 1, %s6
  %s9 = scalar_select 0, %s8, %s6
  %v10 = vstv %s3
  %v11 = vunpack.i.l.bf16 %v10
  %v13 = vunpack.i.h.bf16 %v10
  %v15 = vstv %s3
  %v16 = vunpack.i.l.bf16 %v15
  %v18 = vunpack.i.h.bf16 %v15
  %v20 = vstv %s1
  %v21 = vunpack.i.l.bf16 %v20
  %v23 = vunpack.i.h.bf16 %v20
  $region1: #{model_forward.2} parent=0
    #allocation17 [shape = 'u8[1024]{0}', space=vmem, size = 0x400, dematerialized = true, scoped, tag = 'FusionAdapter Buffer %fusion.2 = bf16[3,19]{1,0:T(4,128)(2,1)} fusion(%param_2.28, %param_3.10, %param_4.1), kind=kLoop, calls=%fused_computation.21.clone, metadata={op_name="jit(model_forward)/concatenate" stack_frame_id=20}']
    #allocation18 [shape = 'u8[24576]{0}', space=vmem, size = 0x6000, dematerialized = true, scoped, tag = 'FusionAdapter Buffer %fusion.1 = bf16[19,512]{1,0:T(8,128)(2,1)} fusion(%param_0.39, %param_1.31), kind=kLoop, calls=%fused_computation.3.clone, metadata={op_name="jit(model_forward)/concatenate" stack_frame_id=14}']
    // Predicated region
    $region2: #{model_forward.2} parent=1 // pred_check
      _
    $region3: #{model_forward.2} parent=1 // pred_check_branch
      %26 = sbr.rel (0) target = $region5
    $region4: #{model_forward.2} parent=1 // pred_region
      %s28 = ssub.s32 1, 0
      %s29 = smul.u32 32, %s28
      %p30 = scmp.lt.s32.totalorder 0, 0
      %s31 = scalar_select %p30, 0, 0
      %s32 = smul.addr %s31, 2
      %s33 = scalar_lea.vmem %s2, %s32
      %s35 = ssub.s32 1, 0
      %s36 = smul.u32 32, %s35
    $region5: #{model_forward.2} parent=1 // pred_fallthru
      _
    // Predicated region
    $region6: #{model_forward.2} parent=1 // pred_check
      _
    $region7: #{model_forward.2} parent=1 // pred_check_branch
      %38 = sbr.rel (0) target = $region9
    $region8: #{model_forward.2} parent=1 // pred_region
      _
    $region9: #{model_forward.2} parent=1 // pred_fallthru
      _
    // Predicated region
    $region10: #{model_forward.2} parent=1 // pred_check
      _
    $region11: #{model_forward.2} parent=1 // pred_check_branch
      %40 = sbr.rel (0) target = $region13
    $region12: #{model_forward.2} parent=1 // pred_region
      _
    $region13: #{model_forward.2} parent=1 // pred_fallthru
      _
    %s42 = ssub.s32 1, 0
    %s43 = smul.u32 32, %s42
    %p44 = scmp.lt.s32.totalorder 0, 0
    %s45 = scalar_select %p44, 0, 0
    %s46 = smul.addr %s45, 2
    %s47 = scalar_lea.vmem %s2, %s46
    %s49 = ssub.s32 1, 0
    %s50 = smul.u32 32, %s49
    %p51 = scmp.lt.s32.totalorder 0, 0
    %s52 = scalar_select %p51, 0, 0
    %s53 = smul.addr %s52, 2
    %s54 = scalar_lea.vmem %s2, %s53
    %s56 = ssub.s32 1, 0
    %s57 = smul.u32 32, %s56
    %s58 = ssub.s32 0, 0
    %p59 = scmp.lt.s32.totalorder %s58, 0
    %s60 = scalar_select %p59, 0, 255
    %s61 = sand.u32 15, %s60
    %s62 = sshrl.u32 %s61, 1
    %s63 = sor.u32 %s61, %s62
    %s64 = sand.u32 %s63, 5
    %s65 = sshrl.u32 %s64, 1
    %s66 = sor.u32 %s64, %s65
    %s67 = sand.u32 3, %s66
    %v68 = vld [vmem:[%s54] sm:%s67]
    %v69 = vunpack.c.l.bf16 %v68
    %v70 = vunpack.c.h.bf16 %v68
    %v71 = vlaneseq
    %v72 = vshrl.u32 %v71, 7
    %vm74 = vcmp.lt.s32.totalorder %v72, 3
    %v75 = vsel %vm74, %v69, %v11
    %v76 = vlaneseq
    %v77 = vand.u32 %v76, 127
    %v78 = vadd.s32 %v77, 128
    %vm79 = vcmp.lt.s32.totalorder %v78, 129
    %v80 = vsel %vm79, %v75, %v11
    %v81 = vlaneseq
    %v82 = vand.u32 %v81, 127
    %vm83 = vcmp.lt.s32.totalorder %v82, 110
    %v84 = vsel %vm83, %v80, %v11
    %85 = vrot.lane.b32.xlu0 %v84, 18
    %v86 = vpop.permute.xlu0 %85
    %s88 = sor.u32 15, 7
    %s89 = sand.u32 %s88, 5
    %s90 = sshrl.u32 %s89, 1
    %s91 = sor.u32 %s89, %s90
    %s92 = sand.u32 3, %s91
    %v93 = vld [vmem:[%s4] sm:%s92]
    %v94 = vunpack.c.l.bf16 %v93
    %v95 = vunpack.c.h.bf16 %v93
    %v96 = vlaneseq
    %v97 = vshrl.u32 %v96, 7
    %vm99 = vcmp.lt.s32.totalorder %v97, 3
    %v100 = vsel %vm99, %v94, %v16
    %v101 = vlaneseq
    %v102 = vand.u32 %v101, 127
    %vm104 = vcmp.lt.s32.totalorder %v102, 18
    %v105 = vsel %vm104, %v100, %v16
    %106 = xla_tuple %v105, %v86
    %107 = xla_tuple %106
    %v108 = vmax.f32 %v105, %v86
    %109 = xla_tuple %v108
    %v110 = vpack.c.bf16 0.0, %v108
    %112 = vst [vmem:[#allocation17] sm:$0x3] %v110
    %v113 = vld [vmem:[%s0] sm:$0xf]
    %v114 = vunpack.c.l.bf16 %v113
    %v115 = vunpack.c.h.bf16 %v113
    %v116 = vlaneseq
    %v117 = vshrl.u32 %v116, 7
    %vm119 = vcmp.lt.s32.totalorder %v117, 18
    %v120 = vsel %vm119, %v114, %v21
    %v121 = vpack.c.bf16 0.0, %v120
    %123 = vst [vmem:[#allocation18] sm:$0xf] %v121
    %s124 = scalar_lea.vmem %s0, 4
    %v125 = vld [vmem:[%s124] sm:$0xf]
    %v126 = vunpack.c.l.bf16 %v125
    %v127 = vunpack.c.h.bf16 %v125
    %v128 = vlaneseq
    %v129 = vshrl.u32 %v128, 7
    %vm131 = vcmp.lt.s32.totalorder %v129, 18
    %v132 = vsel %vm131, %v126, %v21
    %s133 = scalar_lea.vmem [#allocation18], 4
    %v134 = vpack.c.bf16 0.0, %v132
    %136 = vst [vmem:[%s133] sm:$0xf] %v134
    %s137 = scalar_lea.vmem %s0, 8
    %v138 = vld [vmem:[%s137] sm:$0xf]
    %v139 = vunpack.c.l.bf16 %v138
    %v140 = vunpack.c.h.bf16 %v138
    %v141 = vlaneseq
    %v142 = vshrl.u32 %v141, 7
    %vm144 = vcmp.lt.s32.totalorder %v142, 18
    %v145 = vsel %vm144, %v139, %v21
    %s146 = scalar_lea.vmem [#allocation18], 8
    %v147 = vpack.c.bf16 0.0, %v145
    %149 = vst [vmem:[%s146] sm:$0xf] %v147
    %s150 = scalar_lea.vmem %s0, 12
    %v151 = vld [vmem:[%s150] sm:$0xf]
    %v152 = vunpack.c.l.bf16 %v151
    %v153 = vunpack.c.h.bf16 %v151
    %v154 = vlaneseq
    %v155 = vshrl.u32 %v154, 7
    %vm157 = vcmp.lt.s32.totalorder %v155, 18
    %v158 = vsel %vm157, %v152, %v21
    %s159 = scalar_lea.vmem [#allocation18], 12
    %v160 = vpack.c.bf16 0.0, %v158
    %162 = vst [vmem:[%s159] sm:$0xf] %v160
    %s163 = scalar_lea.vmem %s0, 16
    %v164 = vld [vmem:[%s163] sm:$0xf]
    %v165 = vunpack.c.l.bf16 %v164
    %v166 = vunpack.c.h.bf16 %v164
    %v167 = vlaneseq
    %v168 = vshrl.u32 %v167, 7
    %v169 = vadd.s32 %v168, 8
    %vm170 = vcmp.lt.s32.totalorder %v169, 18
    %v171 = vsel %vm170, %v165, %v21
    %s172 = scalar_lea.vmem [#allocation18], 16
    %v173 = vpack.c.bf16 0.0, %v171
    %175 = vst [vmem:[%s172] sm:$0xf] %v173
    %s176 = scalar_lea.vmem %s0, 20
    %v177 = vld [vmem:[%s176] sm:$0xf]
    %v178 = vunpack.c.l.bf16 %v177
    %v179 = vunpack.c.h.bf16 %v177
    %v180 = vlaneseq
    %v181 = vshrl.u32 %v180, 7
    %v182 = vadd.s32 %v181, 8
    %vm183 = vcmp.lt.s32.totalorder %v182, 18
    %v184 = vsel %vm183, %v178, %v21
    %s185 = scalar_lea.vmem [#allocation18], 20
    %v186 = vpack.c.bf16 0.0, %v184
    %188 = vst [vmem:[%s185] sm:$0xf] %v186
    %s189 = scalar_lea.vmem %s0, 24
    %v190 = vld [vmem:[%s189] sm:$0xf]
    %v191 = vunpack.c.l.bf16 %v190
    %v192 = vunpack.c.h.bf16 %v190
    %v193 = vlaneseq
    %v194 = vshrl.u32 %v193, 7
    %v195 = vadd.s32 %v194, 8
    %vm196 = vcmp.lt.s32.totalorder %v195, 18
    %v197 = vsel %vm196, %v191, %v21
    %s198 = scalar_lea.vmem [#allocation18], 24
    %v199 = vpack.c.bf16 0.0, %v197
    %201 = vst [vmem:[%s198] sm:$0xf] %v199
    %s202 = scalar_lea.vmem %s0, 28
    %v203 = vld [vmem:[%s202] sm:$0xf]
    %v204 = vunpack.c.l.bf16 %v203
    %v205 = vunpack.c.h.bf16 %v203
    %v206 = vlaneseq
    %v207 = vshrl.u32 %v206, 7
    %v208 = vadd.s32 %v207, 8
    %vm209 = vcmp.lt.s32.totalorder %v208, 18
    %v210 = vsel %vm209, %v204, %v21
    %s211 = scalar_lea.vmem [#allocation18], 28
    %v212 = vpack.c.bf16 0.0, %v210
    %214 = vst [vmem:[%s211] sm:$0xf] %v212
    %s215 = scalar_lea.vmem %s0, 32
    %s217 = sor.u32 255, 127
    %s218 = sand.u32 %s217, 85
    %s219 = sshrl.u32 %s218, 1
    %s220 = sor.u32 %s218, %s219
    %s221 = sand.u32 51, %s220
    %s222 = sshrl.u32 %s221, 2
    %s223 = sor.u32 %s221, %s222
    %s224 = sand.u32 15, %s223
    %v225 = vld [vmem:[%s215] sm:%s224]
    %v226 = vunpack.c.l.bf16 %v225
    %v227 = vunpack.c.h.bf16 %v225
    %v228 = vlaneseq
    %v229 = vshrl.u32 %v228, 7
    %v230 = vadd.s32 %v229, 16
    %vm231 = vcmp.lt.s32.totalorder %v230, 18
    %v232 = vsel %vm231, %v226, %v21
    %s233 = scalar_lea.vmem [#allocation18], 32
    %v234 = vpack.c.bf16 0.0, %v232
    %236 = vst [vmem:[%s233] sm:$0xf] %v234
    %s237 = scalar_lea.vmem %s0, 36
    %s239 = sor.u32 255, 127
    %s240 = sand.u32 %s239, 85
    %s241 = sshrl.u32 %s240, 1
    %s242 = sor.u32 %s240, %s241
    %s243 = sand.u32 51, %s242
    %s244 = sshrl.u32 %s243, 2
    %s245 = sor.u32 %s243, %s244
    %s246 = sand.u32 15, %s245
    %v247 = vld [vmem:[%s237] sm:%s246]
    %v248 = vunpack.c.l.bf16 %v247
    %v249 = vunpack.c.h.bf16 %v247
    %v250 = vlaneseq
    %v251 = vshrl.u32 %v250, 7
    %v252 = vadd.s32 %v251, 16
    %vm253 = vcmp.lt.s32.totalorder %v252, 18
    %v254 = vsel %vm253, %v248, %v21
    %s255 = scalar_lea.vmem [#allocation18], 36
    %v256 = vpack.c.bf16 0.0, %v254
    %258 = vst [vmem:[%s255] sm:$0xf] %v256
    %s259 = scalar_lea.vmem %s0, 40
    %s261 = sor.u32 255, 127
    %s262 = sand.u32 %s261, 85
    %s263 = sshrl.u32 %s262, 1
    %s264 = sor.u32 %s262, %s263
    %s265 = sand.u32 51, %s264
    %s266 = sshrl.u32 %s265, 2
    %s267 = sor.u32 %s265, %s266
    %s268 = sand.u32 15, %s267
    %v269 = vld [vmem:[%s259] sm:%s268]
    %v270 = vunpack.c.l.bf16 %v269
    %v271 = vunpack.c.h.bf16 %v269
    %v272 = vlaneseq
    %v273 = vshrl.u32 %v272, 7
    %v274 = vadd.s32 %v273, 16
    %vm275 = vcmp.lt.s32.totalorder %v274, 18
    %v276 = vsel %vm275, %v270, %v21
    %s277 = scalar_lea.vmem [#allocation18], 40
    %v278 = vpack.c.bf16 0.0, %v276
    %280 = vst [vmem:[%s277] sm:$0xf] %v278
    %s281 = scalar_lea.vmem %s0, 44
    %s283 = sor.u32 255, 127
    %s284 = sand.u32 %s283, 85
    %s285 = sshrl.u32 %s284, 1
    %s286 = sor.u32 %s284, %s285
    %s287 = sand.u32 51, %s286
    %s288 = sshrl.u32 %s287, 2
    %s289 = sor.u32 %s287, %s288
    %s290 = sand.u32 15, %s289
    %v291 = vld [vmem:[%s281] sm:%s290]
    %v292 = vunpack.c.l.bf16 %v291
    %v293 = vunpack.c.h.bf16 %v291
    %v294 = vlaneseq
    %v295 = vshrl.u32 %v294, 7
    %v296 = vadd.s32 %v295, 16
    %vm297 = vcmp.lt.s32.totalorder %v296, 18
    %v298 = vsel %vm297, %v292, %v21
    %s299 = scalar_lea.vmem [#allocation18], 44
    %v300 = vpack.c.bf16 0.0, %v298
    %302 = vst [vmem:[%s299] sm:$0xf] %v300
    %v304 = vld [vmem:[#allocation17] sm:$0x3]
    %v305 = vld [vmem:[#allocation18] sm:$0xff]
    %v306 = vld [vmem:[#allocation18 + $0x8] sm:$0xff]
    %v307 = vld [vmem:[#allocation18 + $0x10] sm:$0xff]
    %v308 = vld [vmem:[#allocation18 + $0x18] sm:$0xff]
    %v309 = vld [vmem:[#allocation18 + $0x20] sm:$0x33]
    %v310 = vld [vmem:[#allocation18 + $0x28] sm:$0x33]
    %v317 = vunpack.c.l.b16 %v305
    %v318 = vunpack.c.h.b16 %v305
    %v319 = vunpack.c.l.b16 %v306
    %v320 = vunpack.c.h.b16 %v306
    %v321 = vunpack.c.l.b16 %v307
    %v322 = vunpack.c.h.b16 %v307
    %v323 = vunpack.c.l.b16 %v308
    %v324 = vunpack.c.h.b16 %v308
    %v325 = vunpack.c.l.b16 %v309
    %v326 = vunpack.c.h.b16 %v309
    %v327 = vunpack.c.l.b16 %v310
    %v328 = vunpack.c.h.b16 %v310
    %v329 = vpack.c.b16 %v321, %v317
    %v330 = vpack.c.b16 %v322, %v318
    %v331 = vpack.c.b16 %v323, %v319
    %v332 = vpack.c.b16 %v324, %v320
    %v333 = vpack.c.b16 %v325, %v325
    %v334 = vpack.c.b16 %v326, %v326
    %v335 = vpack.c.b16 %v327, %v327
    %v336 = vpack.c.b16 %v328, %v328
    %vm341 = vcmask 154624
    %v343 = vsel %vm341, %v304, 0
    %vm345 = vcmask 1040384
    %vm346 = vcmask 1041408
    %v347 = vsel %vm345, 4294967295, 65535
    %v348 = vsel %vm346, %v347, 0
    %v350 = vand.u32 %v333, %v348
    %v353 = vand.u32 %v334, %v348
    %v356 = vand.u32 %v335, %v348
    %v359 = vand.u32 %v336, %v348
    %361 = vmatprep.subr.bf16.mxu0 %v330
    %362 = vmatpush1.bf16.msra.mxu0 %v329
    %363 = vmatprep.subr.bf16.mxu0 %v353
    %364 = vmatpush1.bf16.msra.mxu0 %v350
    %365 = vmatprep.subr.bf16.mxu0 0
    %366 = vmatpush1.bf16.msra.mxu0 0
    %367 = vmatprep.subr.bf16.mxu0 0
    %368 = vmatpush1.bf16.msra.mxu0 0
    %369 = vmatprep.subr.bf16.mxu0 0
    %370 = vmatpush1.bf16.msra.mxu0 0
    %371 = vmatprep.subr.bf16.mxu0 0
    %372 = vmatpush1.bf16.msra.mxu0 0
    %373 = vmatprep.subr.bf16.mxu0 0
    %374 = vmatpush1.bf16.msra.mxu0 0
    %375 = vmatprep.subr.bf16.mxu0 0
    %376 = vmatpush1.bf16.msra.mxu0 0
    %377 = vmatprep.subr.bf16.mxu0 0
    %378 = vmatpush1.bf16.msra.mxu0 0
    %379 = vmatprep.subr.bf16.mxu0 0
    %380 = vmatpush1.bf16.msra.mxu0 0
    %381 = vmatprep.subr.bf16.mxu0 0
    %382 = vmatpush1.bf16.msra.mxu0 0
    %383 = vmatprep.subr.bf16.mxu0 0
    %384 = vmatpush1.bf16.msra.mxu0 0
    %385 = vmatprep.subr.bf16.mxu0 0
    %386 = vmatpush1.bf16.msra.mxu0 0
    %387 = vmatprep.subr.bf16.mxu0 0
    %388 = vmatpush1.bf16.msra.mxu0 0
    %389 = vmatprep.subr.bf16.mxu0 0
    %390 = vmatpush1.bf16.msra.mxu0 0
    %391 = vmatprep.subr.bf16.mxu0 0
    %392 = vmatpush1.bf16.msra.mxu0 0
    %393 = vmatprep.mubr.bf16.mxu0 0
    %394 = vmatmul.mubr.bf16.gmra.mrb[0].mxu0 %v343
    %v395 = vpop.f32.mrb[0].mxu0
    %v396 = vadd.f32 0.0, %v395
    %v397 = vpop.f32.mrb[0].mxu0
    %v398 = vadd.f32 0.0, %v397
    %v399 = vpop.f32.mrb[0].mxu0
    %v400 = vpop.f32.mrb[0].mxu0
    %401 = vdwg.mxu0
    %402 = vmatprep.subr.bf16.mxu0 %v332
    %403 = vmatpush1.bf16.msra.mxu0 %v331
    %404 = vmatprep.subr.bf16.mxu0 %v359
    %405 = vmatpush1.bf16.msra.mxu0 %v356
    %406 = vmatprep.subr.bf16.mxu0 0
    %407 = vmatpush1.bf16.msra.mxu0 0
    %408 = vmatprep.subr.bf16.mxu0 0
    %409 = vmatpush1.bf16.msra.mxu0 0
    %410 = vmatprep.subr.bf16.mxu0 0
    %411 = vmatpush1.bf16.msra.mxu0 0
    %412 = vmatprep.subr.bf16.mxu0 0
    %413 = vmatpush1.bf16.msra.mxu0 0
    %414 = vmatprep.subr.bf16.mxu0 0
    %415 = vmatpush1.bf16.msra.mxu0 0
    %416 = vmatprep.subr.bf16.mxu0 0
    %417 = vmatpush1.bf16.msra.mxu0 0
    %418 = vmatprep.subr.bf16.mxu0 0
    %419 = vmatpush1.bf16.msra.mxu0 0
    %420 = vmatprep.subr.bf16.mxu0 0
    %421 = vmatpush1.bf16.msra.mxu0 0
    %422 = vmatprep.subr.bf16.mxu0 0
    %423 = vmatpush1.bf16.msra.mxu0 0
    %424 = vmatprep.subr.bf16.mxu0 0
    %425 = vmatpush1.bf16.msra.mxu0 0
    %426 = vmatprep.subr.bf16.mxu0 0
    %427 = vmatpush1.bf16.msra.mxu0 0
    %428 = vmatprep.subr.bf16.mxu0 0
    %429 = vmatpush1.bf16.msra.mxu0 0
    %430 = vmatprep.subr.bf16.mxu0 0
    %431 = vmatpush1.bf16.msra.mxu0 0
    %432 = vmatprep.subr.bf16.mxu0 0
    %433 = vmatpush1.bf16.msra.mxu0 0
    %434 = vmatprep.mubr.bf16.mxu0 0
    %435 = vmatmul.mubr.bf16.gmra.mrb[0].mxu0 %v343
    %v436 = vpop.f32.mrb[0].mxu0
    %v437 = vadd.f32 0.0, %v436
    %v438 = vpop.f32.mrb[0].mxu0
    %v439 = vadd.f32 0.0, %v438
    %v440 = vpop.f32.mrb[0].mxu0
    %v441 = vpop.f32.mrb[0].mxu0
    %442 = vdwg.mxu0
    %v447 = vcombine.low %v396, %v398
    %v448 = vcombine.low %v437, %v439
    %451 = vst [vmem:[%s5] sm:$0x77] %v447
    %452 = vst [vmem:[%s5 + $0x8] sm:$0x77] %v448
    // Predicated region
    $region14: #{model_forward.2} parent=1 // pred_check
      _
    $region15: #{model_forward.2} parent=1 // pred_check_branch
      %454 = sbr.rel (0) target = $region17
    $region16: #{model_forward.2} parent=1 // pred_region
      _
    $region17: #{model_forward.2} parent=1 // pred_fallthru
      _
    // Predicated region
    $region18: #{model_forward.2} parent=1 // pred_check
      _
    $region19: #{model_forward.2} parent=1 // pred_check_branch
      %456 = sbr.rel (0) target = $region21
    $region20: #{model_forward.2} parent=1 // pred_region
      _
    $region21: #{model_forward.2} parent=1 // pred_fallthru
      _

</llo_original>
